<compile_context>
chip_gen: v6e
topology: v6e:2x2x1
jax: 0.10.0
libtpu: 0.0.40
codegen_flags: <defaults>
</compile_context>

<pallas_src>
import functools

import jax
import jax.numpy as jnp
from jax.experimental import pallas as pl
from jax.experimental.pallas import tpu as pltpu


def _dscl_kernel(lab_col_ref, lab_row_ref, anc_ref, ctr_ref, out_ref, *,
                 n_valid, tile_rows, row_max_const):
    # lab_col_ref: [TR, 1]   int32  labels of this step's anchor rows
    # lab_row_ref: [1, Np]   int32  labels of all contrast columns (resident)
    # anc_ref:     [TR, D]   bf16   anchors, pre-scaled by 1/temperature
    # ctr_ref:     [D, Np]   bf16   contrast features, pre-transposed (resident)
    # out_ref:     [TR, 128] f32    per-row sum of masked log-probs, broadcast
    #                               across 128 lanes (lane-dense unmasked store)
    n_pad = ctr_ref.shape[1]
    i = pl.program_id(0)
    row_start = pl.multiple_of(i * tile_rows, tile_rows)

    # anchor_dot_contrast / T : bf16 x bf16 -> f32 accumulate on the MXU.
    # RHS is already [D, N]; no per-step transpose of the resident slab.
    logits = jax.lax.dot_general(
        anc_ref[...], ctr_ref[...],
        dimension_numbers=(((1,), (0,)), ((), ())),
        preferred_element_type=jnp.float32)                       # [TR, Np]

    shape = (tile_rows, n_pad)
    col = jax.lax.broadcasted_iota(jnp.int32, shape, 1)
    row = jax.lax.broadcasted_iota(jnp.int32, shape, 0) + row_start
    not_self = col != row                                         # off-diagonal
    if n_valid != n_pad:
        # Static branch: padded columns must not contribute to the denominator.
        not_self = jnp.logical_and(not_self, col < n_valid)
    same = lab_col_ref[...] == lab_row_ref[...]                   # [TR, Np]
    pos = jnp.logical_and(same, not_self)                         # positives

    # Numerically-stable logits.  For L2-normalized features the exact row max
    # is the self-similarity 1/T, so the XLU max reduce can be skipped.
    if row_max_const is None:
        logits = logits - jnp.max(logits, axis=1, keepdims=True)
    else:
        logits = logits - row_max_const

    e = jnp.exp(logits)
    e_nd = jnp.where(not_self, e, 0.0)           # exp(logits), diag/pad zeroed
    total = jnp.sum(e_nd, axis=1, keepdims=True)  # == sum_neg + sum_pos
    e_pos = jnp.where(same, e_nd, 0.0)           # == exp(logits) * positives
    # denominator[i, j] = sum_neg + sum_pos - exp_logits[i, j] * pos[i, j]
    denom = total - e_pos
    log_probs = logits - jnp.log(denom)

    row_sum = jnp.sum(jnp.where(pos, log_probs, 0.0), axis=1, keepdims=True)
    out_ref[...] = jnp.broadcast_to(row_sum, (tile_rows, 128))
    # TODO(synk): the original module raises at runtime if log_probs has NaN;
    # no in-kernel assertion equivalent is emitted here.


def _round_up(x, m):
    return ((x + m - 1) // m) * m


def _default_max_tile_rows():
    """256 anchor rows/step on 256-wide-MXU chips (v6e/v7x), 128 otherwise."""
    try:
        kind = jax.devices()[0].device_kind.lower()
    except Exception:
        return 128
    for old in ("v2", "v3", "v4", "v5"):
        if old in kind:
            return 128
    return 256


def _resident_spec(block_shape, index_map):
    """BlockSpec for a block whose index never changes: single-buffer it."""
    buffered = getattr(pl, "Buffered", None)
    if buffered is not None:
        try:
            return pl.BlockSpec(block_shape, index_map,
                                pipeline_mode=buffered(1))
        except TypeError:
            pass  # older jax without pipeline_mode: fall back to default
    return pl.BlockSpec(block_shape, index_map)


def _vmem_limit_bytes(n_pad, d, tile_rows):
    resident = n_pad * d * 2 + n_pad * 4              # contrast^T bf16 + labels (1 buf)
    streamed = 2 * (tile_rows * d * 2 + tile_rows * 4           # anchors + labels
                    + tile_rows * 128 * 4)                       # output tile
    temps = 8 * tile_rows * n_pad * 4                 # logits/exp/mask temporaries
    budget = int(1.25 * (resident + streamed + temps)) + (1 << 20)
    budget = max(budget, 16 << 20)                    # never below smallest default
    return min(budget, 128 << 20)


def dscl_loss_pallas(features, labels=None, *, temperature=0.07,
                     base_temperature=0.07, max_tile_rows=None,
                     assume_l2_normalized=False):
    """Pallas implementation of DSCL.forward (contrast_mode='all').

    assume_l2_normalized=True skips the per-row max reduce (the self-similarity
    1/T is the exact row max for unit-norm features); leave False for arbitrary
    inputs to preserve the reference semantics exactly.
    """
    # TODO(synk): the explicit (possibly asymmetric) `mask=` argument of the
    # PyTorch module is not supported; only `labels` / None (SimCLR) paths.
    bsz, n_views = features.shape[0], features.shape[1]
    feat = features.reshape(bsz, n_views, -1).astype(jnp.float32)
    d = feat.shape[-1]
    n = bsz * n_views

    if max_tile_rows is None:
        max_tile_rows = _default_max_tile_rows()
    tile_rows = min(max_tile_rows, _round_up(n, 8))
    n_pad = _round_up(n, tile_rows)
    grid = n_pad // tile_rows

    # contrast_feature = torch.cat(torch.unbind(features, dim=1), dim=0)
    # (row r = v*bsz + b).  bf16 once in glue; matmul accumulates in f32.
    contrast = jnp.transpose(feat, (1, 0, 2)).reshape(n, d)
    contrast_bf16 = contrast.astype(jnp.bfloat16)
    # Fold 1/T into the (small) anchor operand; scale in f32, round once.
    anchors = (contrast_bf16.astype(jnp.float32)
               * (1.0 / temperature)).astype(jnp.bfloat16)

    if labels is None:
        lab = jnp.arange(bsz, dtype=jnp.int32)   # SimCLR: each sample own class
    else:
        lab = labels.reshape(-1).astype(jnp.int32)
    lab_ext = jnp.tile(lab, (n_views,))          # label of row v*bsz + b

    if n_pad != n:
        pad = n_pad - n
        contrast_bf16 = jnp.pad(contrast_bf16, ((0, pad), (0, 0)))
        anchors = jnp.pad(anchors, ((0, pad), (0, 0)))
        lab_ext_p = jnp.pad(lab_ext, (0, pad))   # padded cols masked in-kernel
    else:
        lab_ext_p = lab_ext
    lab_col = lab_ext_p.reshape(n_pad, 1)
    lab_row = lab_ext_p.reshape(1, n_pad)
    contrast_t = contrast_bf16.T                 # [D, Np]: MXU-friendly RHS

    row_max_const = (1.0 / temperature) if assume_l2_normalized else None
    kernel = functools.partial(_dscl_kernel, n_valid=n, tile_rows=tile_rows,
                               row_max_const=row_max_const)

    # TODO(synk): for very large N*D (v7x: 64 MiB VMEM/TC) the resident [D, N]
    # contrast buffer should be column-tiled with a two-pass/online-softmax
    # variant; the fully-resident form caps the problem size.
    out = pl.pallas_call(
        kernel,
        out_shape=jax.ShapeDtypeStruct((n_pad, 128), jnp.float32),
        grid_spec=pltpu.PrefetchScalarGridSpec(
            num_scalar_prefetch=0,
            grid=(grid,),
            in_specs=[
                pl.BlockSpec((tile_rows, 1), lambda i: (i, 0)),   # anchor labels
                _resident_spec((1, n_pad), lambda i: (0, 0)),     # contrast labels
                pl.BlockSpec((tile_rows, d), lambda i: (i, 0)),   # scaled anchors
                _resident_spec((d, n_pad), lambda i: (0, 0)),     # contrast^T
            ],
            out_specs=pl.BlockSpec((tile_rows, 128), lambda i: (i, 0)),
        ),
        compiler_params=pltpu.CompilerParams(
            dimension_semantics=("parallel",),
            vmem_limit_bytes=_vmem_limit_bytes(n_pad, d, tile_rows)),
    )(lab_col, lab_row, anchors, contrast_t)
    row_sum = out[:n, 0]                                          # [N]

    # num_positives_per_row: exact integer math, cheap O(bsz^2) in glue.
    same_count = jnp.sum((lab[:, None] == lab[None, :]).astype(jnp.float32),
                         axis=1)                                  # [bsz]
    n_pos = n_views * jnp.tile(same_count, (n_views,)) - 1.0      # [N]

    valid = n_pos > 0
    # PyTorch selects rows with >=1 positive via boolean indexing (dynamic
    # shape); replaced with an equivalent masked mean over those rows.
    per_row = jnp.where(valid, row_sum / jnp.where(valid, n_pos, 1.0), 0.0)
    loss_rows = -per_row * (temperature / base_temperature)
    n_valid = jnp.maximum(jnp.sum(valid.astype(jnp.float32)), 1.0)
    return jnp.sum(jnp.where(valid, loss_rows, 0.0)) / n_valid


def dscl_loss_ref(features, labels=None, *, temperature=0.07,
                  base_temperature=0.07, bf16_matmul=False):
    """Pure-JAX reference mirroring the PyTorch forward (contrast_mode='all').

    bf16_matmul=True casts the matmul operands exactly like the kernel does,
    for a tight numerical comparison; False is the exact f32 math."""
    bsz, n_views = features.shape[0], features.shape[1]
    feat = features.reshape(bsz, n_views, -1).astype(jnp.float32)
    n = bsz * n_views
    d = feat.shape[-1]
    contrast = jnp.transpose(feat, (1, 0, 2)).reshape(n, d)

    if labels is None:
        base = jnp.eye(bsz, dtype=jnp.float32)
    else:
        lab = labels.reshape(-1, 1)
        base = (lab == lab.T).astype(jnp.float32)
    mask = jnp.tile(base, (n_views, n_views))
    logits_mask = 1.0 - jnp.eye(n, dtype=jnp.float32)
    pos = mask * logits_mask
    neg = 1.0 - mask

    if bf16_matmul:
        c = contrast.astype(jnp.bfloat16)
        a = (c.astype(jnp.float32) * (1.0 / temperature)).astype(jnp.bfloat16)
        adc = jnp.einsum('md,nd->mn', a, c, preferred_element_type=jnp.float32)
    else:
        adc = (contrast @ contrast.T) / temperature
    logits = adc - jnp.max(adc, axis=1, keepdims=True)
    e = jnp.exp(logits)
    denom = (jnp.sum(e * neg, axis=1, keepdims=True)
             + jnp.sum(e * pos, axis=1, keepdims=True)
             - e * pos)
    lp = logits - jnp.log(denom)
    npos = jnp.sum(pos, axis=1)
    row = jnp.sum(lp * pos, axis=1)
    valid = npos > 0
    per_row = jnp.where(valid, row / jnp.where(valid, npos, 1.0), 0.0)
    loss_rows = -per_row * (temperature / base_temperature)
    n_valid = jnp.maximum(jnp.sum(valid.astype(jnp.float32)), 1.0)
    return jnp.sum(jnp.where(valid, loss_rows, 0.0)) / n_valid


if __name__ == "__main__":
    key = jax.random.PRNGKey(0)
    k_feat, k_lab, k_feat2, k_lab2 = jax.random.split(key, 4)

    bsz, n_views, d = 8, 2, 32
    features = jax.random.normal(k_feat, (bsz, n_views, d), dtype=jnp.float32)
    # L2-normalize along the feature dim (standard for SupCon features).
    features = features / jnp.linalg.norm(features, axis=-1, keepdims=True)
    labels = jax.random.randint(k_lab, (bsz,), 0, 4)

    loss = dscl_loss_pallas(features, labels)
    loss = jax.block_until_ready(loss)
    assert jnp.isfinite(loss), "loss is not finite"

    # Tight check vs. a JAX reference that mirrors the kernel's bf16 matmul.
    ref_bf16 = dscl_loss_ref(features, labels, bf16_matmul=True)
    assert jnp.allclose(loss, ref_bf16, rtol=5e-3, atol=1e-4), (loss, ref_bf16)
    # Loose check vs. the exact f32 PyTorch-equivalent math (bf16 operands
    # shift the result at the ~1e-3 relative level).
    ref_f32 = dscl_loss_ref(features, labels)
    assert jnp.allclose(loss, ref_f32, rtol=5e-2, atol=1e-2), (loss, ref_f32)

    # Normalized-features fast path (row max replaced by the constant 1/T).
    loss_n = jax.block_until_ready(
        dscl_loss_pallas(features, labels, assume_l2_normalized=True))
    assert jnp.isfinite(loss_n), "normalized-path loss is not finite"
    assert jnp.allclose(loss_n, ref_f32, rtol=5e-2, atol=1e-2), (loss_n, ref_f32)

    # Unsupervised (SimCLR) path: labels=None.
    loss_u = jax.block_until_ready(dscl_loss_pallas(features, None))
    ref_u = dscl_loss_ref(features, None)
    assert jnp.isfinite(loss_u), "unsupervised loss is not finite"
    assert jnp.allclose(loss_u, ref_u, rtol=5e-2, atol=1e-2), (loss_u, ref_u)

    # Odd batch size: exercises the padding path (N=10 -> padded to 16).
    bsz2 = 5
    feat2 = jax.random.normal(k_feat2, (bsz2, n_views, d), dtype=jnp.float32)
    feat2 = feat2 / jnp.linalg.norm(feat2, axis=-1, keepdims=True)
    labels2 = jax.random.randint(k_lab2, (bsz2,), 0, 3)
    loss_p = jax.block_until_ready(dscl_loss_pallas(feat2, labels2))
    ref_p = dscl_loss_ref(feat2, labels2, bf16_matmul=True)
    assert jnp.isfinite(loss_p), "padded-path loss is not finite"
    assert jnp.allclose(loss_p, ref_p, rtol=5e-3, atol=1e-4), (loss_p, ref_p)

    print("KERNEL_OK")
</pallas_src>

<mosaic_0001>
module attributes {stable_mosaic.version = 11 : i64} {
  func.func @_dscl_kernel(%arg0: i32, %arg1: memref<16x1xi32, #tpu.memory_space<vmem>>, %arg2: memref<1x16xi32, #tpu.memory_space<vmem>>, %arg3: memref<16x32xbf16, #tpu.memory_space<vmem>>, %arg4: memref<32x16xbf16, #tpu.memory_space<vmem>>, %arg5: memref<16x128xf32, #tpu.memory_space<vmem>>) attributes {dimension_semantics = [#tpu.dimension_semantics<parallel>], iteration_bounds = array<i64: 1>, scalar_prefetch = 0 : i64, scratch_operands = 0 : i64, tpu.core_type = #tpu.core_type<tc>, window_params = [{transform_indices = @transform_0, window_bounds = array<i64: 16, 1>}, {pipeline_mode = #tpu.pipeline_mode<synchronous>, transform_indices = @transform_1, window_bounds = array<i64: 1, 16>}, {transform_indices = @transform_2, window_bounds = array<i64: 16, 32>}, {pipeline_mode = #tpu.pipeline_mode<synchronous>, transform_indices = @transform_3, window_bounds = array<i64: 32, 16>}, {transform_indices = @transform_4, window_bounds = array<i64: 16, 128>}]} {
    %c16_i32 = arith.constant 16 : i32
    %0 = arith.muli %arg0, %c16_i32 : i32
    %1 = tpu.assume_multiple %0, 16 : i32
    %c0 = arith.constant 0 : index
    %c0_0 = arith.constant 0 : index
    %2 = vector.load %arg3[%c0, %c0_0] : memref<16x32xbf16, #tpu.memory_space<vmem>>, vector<16x32xbf16>
    %c0_1 = arith.constant 0 : index
    %c0_2 = arith.constant 0 : index
    %3 = vector.load %arg4[%c0_1, %c0_2] : memref<32x16xbf16, #tpu.memory_space<vmem>>, vector<32x16xbf16>
    %cst = arith.constant dense<0.000000e+00> : vector<16x16xf32>
    %4 = tpu.matmul %2, %3, %cst {dimension_numbers = #tpu.dot_dimension_numbers<[1], [0], [0], [1], [0, 0, 1, 1], [], []>} : vector<16x32xbf16>, vector<32x16xbf16>, vector<16x16xf32> -> vector<16x16xf32>
    %5 = tpu.iota {dimensions = array<i32: 1>} : vector<16x16xi32>
    %6 = tpu.iota {dimensions = array<i32: 0>} : vector<16x16xi32>
    %7 = vector.broadcast %1 : i32 to vector<16x16xi32>
    %8 = arith.addi %6, %7 : vector<16x16xi32>
    %9 = arith.cmpi ne, %5, %8 : vector<16x16xi32>
    %c0_3 = arith.constant 0 : index
    %c0_4 = arith.constant 0 : index
    %10 = vector.load %arg1[%c0_3, %c0_4] : memref<16x1xi32, #tpu.memory_space<vmem>>, vector<16x1xi32>
    %c0_5 = arith.constant 0 : index
    %c0_6 = arith.constant 0 : index
    %11 = vector.load %arg2[%c0_5, %c0_6] : memref<1x16xi32, #tpu.memory_space<vmem>>, vector<1x16xi32>
    %12 = vector.broadcast %10 : vector<16x1xi32> to vector<16x16xi32>
    %13 = vector.broadcast %11 : vector<1x16xi32> to vector<16x16xi32>
    %14 = arith.cmpi eq, %12, %13 : vector<16x16xi32>
    %15 = arith.andi %14, %9 : vector<16x16xi1>
    %cst_7 = arith.constant dense<0xFF800000> : vector<16xf32>
    %16 = vector.multi_reduction <maximumf>, %4, %cst_7 [1] : vector<16x16xf32> to vector<16xf32>
    %17 = vector.shape_cast %16 : vector<16xf32> to vector<16x1xf32>
    %18 = vector.broadcast %17 : vector<16x1xf32> to vector<16x16xf32>
    %19 = arith.subf %4, %18 : vector<16x16xf32>
    %20 = math.exp %19 : vector<16x16xf32>
    %cst_8 = arith.constant 0.000000e+00 : f32
    %21 = vector.broadcast %cst_8 : f32 to vector<16x16xf32>
    %22 = arith.select %9, %20, %21 : vector<16x16xi1>, vector<16x16xf32>
    %cst_9 = arith.constant dense<0.000000e+00> : vector<16xf32>
    %23 = vector.multi_reduction <add>, %22, %cst_9 [1] : vector<16x16xf32> to vector<16xf32>
    %24 = vector.shape_cast %23 : vector<16xf32> to vector<16x1xf32>
    %cst_10 = arith.constant 0.000000e+00 : f32
    %25 = vector.broadcast %cst_10 : f32 to vector<16x16xf32>
    %26 = arith.select %14, %22, %25 : vector<16x16xi1>, vector<16x16xf32>
    %27 = vector.broadcast %24 : vector<16x1xf32> to vector<16x16xf32>
    %28 = arith.subf %27, %26 : vector<16x16xf32>
    %29 = math.log %28 : vector<16x16xf32>
    %30 = arith.subf %19, %29 : vector<16x16xf32>
    %cst_11 = arith.constant 0.000000e+00 : f32
    %31 = vector.broadcast %cst_11 : f32 to vector<16x16xf32>
    %32 = arith.select %15, %30, %31 : vector<16x16xi1>, vector<16x16xf32>
    %cst_12 = arith.constant dense<0.000000e+00> : vector<16xf32>
    %33 = vector.multi_reduction <add>, %32, %cst_12 [1] : vector<16x16xf32> to vector<16xf32>
    %34 = vector.shape_cast %33 : vector<16xf32> to vector<16x1xf32>
    %35 = vector.shape_cast %34 : vector<16x1xf32> to vector<16x1xf32>
    %36 = vector.broadcast %35 : vector<16x1xf32> to vector<16x128xf32>
    %c0_13 = arith.constant 0 : index
    %c0_14 = arith.constant 0 : index
    %37 = vector.load %arg5[%c0_13, %c0_14] : memref<16x128xf32, #tpu.memory_space<vmem>>, vector<16x128xf32>
    tpu.vector_store %arg5[%c0_13, %c0_14], %36 {strides = array<i32>} : memref<16x128xf32, #tpu.memory_space<vmem>>, vector<16x128xf32>,
    return
  }
  func.func @transform_0(%arg0: i32) -> (i32, i32) {
    %c0_i32 = arith.constant 0 : i32
    %c0_i32_0 = arith.constant 0 : i32
    return %arg0, %c0_i32 : i32, i32
  }
  func.func @transform_1(%arg0: i32) -> (i32, i32) {
    %c0_i32 = arith.constant 0 : i32
    %c0_i32_0 = arith.constant 0 : i32
    %c0_i32_1 = arith.constant 0 : i32
    return %c0_i32, %c0_i32_0 : i32, i32
  }
  func.func @transform_2(%arg0: i32) -> (i32, i32) {
    %c0_i32 = arith.constant 0 : i32
    %c0_i32_0 = arith.constant 0 : i32
    return %arg0, %c0_i32 : i32, i32
  }
  func.func @transform_3(%arg0: i32) -> (i32, i32) {
    %c0_i32 = arith.constant 0 : i32
    %c0_i32_0 = arith.constant 0 : i32
    %c0_i32_1 = arith.constant 0 : i32
    return %c0_i32, %c0_i32_0 : i32, i32
  }
  func.func @transform_4(%arg0: i32) -> (i32, i32) {
    %c0_i32 = arith.constant 0 : i32
    %c0_i32_0 = arith.constant 0 : i32
    return %arg0, %c0_i32 : i32, i32
  }
}

</mosaic_0001>

<llo_original>
// kernel: tpu_custom_call.1
$region0: #{tpu_custom_call.1}
  #allocation0 [shape = 'u32[]', space=smem, size = 0x4, offset = 0x4, fixed_abs, tag = 'smem constant byte address 0x4 - core index']
  #allocation1 [shape = 'u32[144,128]{1,0:T(1,128)}', space=vmem, size = 0x12000, scoped, tag = 'internal scratch']
  %s0 = inlined_call_operand.vmem [shape: s32[16,1], index: 0, kind: input, shape index: {}]
  %s1 = inlined_call_operand.vmem [shape: s32[1,16], index: 1, kind: input, shape index: {}]
  %s2 = inlined_call_operand.vmem [shape: bf16[16,32], index: 2, kind: input, shape index: {}]
  %s3 = inlined_call_operand.vmem [shape: bf16[32,16], index: 3, kind: input, shape index: {}]
  %s4 = inlined_call_operand.hbm [shape: f32[16,128], index: 4, kind: output, shape index: {}]
  %s5 = sld [smem:[#allocation0]]
  $region26: #{tpu_custom_call.1} parent=0
    _
  %s7 = ssub.s32 1, %s5
  %s8 = scalar_select 0, %s7, %s5
  $region1: #{tpu_custom_call.1} parent=0
    #allocation2 [shape = 'u8[8192]{0}', space=vmem, size = 0x2000, scoped, tag = 'output window, operand 0, single buffered']
    #allocation3 [shape = 's32[1]{0}', space=sflag, size = 0x4, scoped, tag = 'scoped memory for tpu_custom_call.1']
    %9 = vsyncpa [#allocation3], 0
    // Predicated region
    $region2: #{tpu_custom_call.1} parent=1 // pred_check
      _
    $region3: #{tpu_custom_call.1} parent=1 // pred_check_branch
      %11 = sbr.rel (0) target = $region5
    $region4: #{tpu_custom_call.1} parent=1 // pred_region
      _
    $region5: #{tpu_custom_call.1} parent=1 // pred_fallthru
      _
    // Predicated region
    $region6: #{tpu_custom_call.1} parent=1 // pred_check
      _
    $region7: #{tpu_custom_call.1} parent=1 // pred_check_branch
      %13 = sbr.rel (0) target = $region9
    $region8: #{tpu_custom_call.1} parent=1 // pred_region
      _
    $region9: #{tpu_custom_call.1} parent=1 // pred_fallthru
      _
    // Predicated region
    $region10: #{tpu_custom_call.1} parent=1 // pred_check
      _
    $region11: #{tpu_custom_call.1} parent=1 // pred_check_branch
      %15 = sbr.rel (0) target = $region13
    $region12: #{tpu_custom_call.1} parent=1 // pred_region
      _
    $region13: #{tpu_custom_call.1} parent=1 // pred_fallthru
      _
    // Predicated region
    $region14: #{tpu_custom_call.1} parent=1 // pred_check
      _
    $region15: #{tpu_custom_call.1} parent=1 // pred_check_branch
      %17 = sbr.rel (0) target = $region17
    $region16: #{tpu_custom_call.1} parent=1 // pred_region
      _
    $region17: #{tpu_custom_call.1} parent=1 // pred_fallthru
      _
    %s19 = smul.u32 0, 16
    %v20 = vld [vmem:[%s2] sm:$0xf]
    %v21 = vld [vmem:[%s2 + $0x4] sm:$0xf]
    %v22 = vld [vmem:[%s3] sm:$0xf]
    %v23 = vld [vmem:[%s3 + $0x4] sm:$0xf]
    %v24 = vld [vmem:[%s3 + $0x8] sm:$0xf]
    %v25 = vld [vmem:[%s3 + $0xc] sm:$0xf]
    %v28 = vunpack.c.l.b16 %v20
    %v29 = vunpack.c.l.b16 %v21
    %v30 = vpack.c.b16 %v29, %v28
    %v35 = vunpack.c.l.b16 %v22
    %v36 = vunpack.c.l.b16 %v23
    %v37 = vunpack.c.l.b16 %v24
    %v38 = vunpack.c.l.b16 %v25
    %v39 = vpack.c.b16 %v36, %v35
    %v40 = vpack.c.b16 %v38, %v37
    %vm43 = vcmask 261120
    %v45 = vsel %vm43, %v30, 0
    %47 = vmatprep.subr.bf16.mxu0 0
    %48 = vmatpush1.bf16.msra.mxu0 0
    %49 = vmatprep.subr.bf16.mxu0 0
    %50 = vmatpush1.bf16.msra.mxu0 0
    %51 = vmatprep.subr.bf16.mxu0 0
    %52 = vmatpush1.bf16.msra.mxu0 0
    %53 = vmatprep.subr.bf16.mxu0 0
    %54 = vmatpush1.bf16.msra.mxu0 0
    %55 = vmatprep.subr.bf16.mxu0 0
    %56 = vmatpush1.bf16.msra.mxu0 0
    %57 = vmatprep.subr.bf16.mxu0 0
    %58 = vmatpush1.bf16.msra.mxu0 0
    %59 = vmatprep.subr.bf16.mxu0 0
    %60 = vmatpush1.bf16.msra.mxu0 %v40
    %61 = vmatprep.subr.bf16.mxu0 0
    %62 = vmatpush1.bf16.msra.mxu0 %v39
    %63 = vmatprep.subr.bf16.mxu0 0
    %64 = vmatpush2.bf16.msra.mxu0 0
    %65 = vmatprep.subr.bf16.mxu0 0
    %66 = vmatpush2.bf16.msra.mxu0 0
    %67 = vmatprep.subr.bf16.mxu0 0
    %68 = vmatpush2.bf16.msra.mxu0 0
    %69 = vmatprep.subr.bf16.mxu0 0
    %70 = vmatpush2.bf16.msra.mxu0 0
    %71 = vmatprep.subr.bf16.mxu0 0
    %72 = vmatpush2.bf16.msra.mxu0 0
    %73 = vmatprep.subr.bf16.mxu0 0
    %74 = vmatpush2.bf16.msra.mxu0 0
    %75 = vmatprep.subr.bf16.mxu0 0
    %76 = vmatpush2.bf16.msra.mxu0 0
    %77 = vmatprep.subr.bf16.mxu0 0
    %78 = vmatpush2.bf16.msra.mxu0 0
    %79 = vmatprep.mubr.bf16.mxu0 0
    %80 = vmatmul.mubr.bf16.gmra.mxu0 %v45
    %v81 = vpop.f32.mrf.mxu0
    %v82 = vadd.f32 0.0, %v81
    %v83 = vpop.f32.mrf.mxu0
    %v84 = vpop.f32.mrf.mxu0
    %v85 = vadd.f32 0.0, %v84
    %v86 = vpop.f32.mrf.mxu0
    %87 = vdwg.mxu0
    %v88 = vlaneseq
    %v89 = vand.u32 %v88, 127
    %v90 = vlaneseq
    %v91 = vshrl.u32 %v90, 7
    %v92 = vadd.s32 %v91, 8
    %v93 = vstv %s19
    %v94 = vadd.s32 %v91, %v93
    %v95 = vadd.s32 %v92, %v93
    %vm96 = vcmp.ne.s32.totalorder %v89, %v94
    %vm97 = vcmp.ne.s32.totalorder %v89, %v95
    %v98 = vld [vmem:[%s0] sm:$0xff]
    %v99 = vld [vmem:[%s0 + $0x8] sm:$0xff]
    %v100 = vld [vmem:[%s1] sm:$0x1]
    %101 = vset.pattern.permute.xlu0 0
    %102 = vperm.xlu0 %101, %v98
    %v103 = vpop.permute.xlu0 %102
    %104 = vset.pattern.permute.xlu0 0
    %105 = vperm.xlu0 %104, %v99
    %v106 = vpop.permute.xlu0 %105
    %v107 = vlaneseq
    %v108 = vshrl.u32 %v107, 7
    %v109 = vsub.s32 0, %v108
    %v110 = vrot.slane %v100, %v109
    %vm111 = vcmp.eq.s32.totalorder %v103, %v110
    %vm112 = vcmp.eq.s32.totalorder %v106, %v110
    %vm113 = vmand %vm111, %vm96
    %vm114 = vmand %vm112, %vm97
    %vm115 = vcmask 130048
    %v116 = vsel %vm115, %v82, -inf
    %117 = vmax.xlane.f32.xlu0 %v116
    %v118 = vpop.xlane.xlu0 %117
    %v119 = vsel %vm115, %v85, -inf
    %120 = vmax.xlane.f32.xlu0 %v119
    %v121 = vpop.xlane.xlu0 %120
    %v122 = vsub.f32 %v82, %v118
    %v123 = vsub.f32 %v85, %v121
    %v124 = vmul.f32 %v122, 1.442695
    %v125 = vpow.pop %v124
    %v126 = vmul.f32 %v123, 1.442695
    %v127 = vpow.pop %v126
    %v128 = vsel %vm96, %v125, 0.0
    %v129 = vsel %vm97, %v127, 0.0
    %v130 = vsel %vm115, %v128, 0.0
    %131 = vadd.xlane.f32.xlu0 %v130
    %v132 = vpop.xlane.xlu0 %131
    %v133 = vsel %vm115, %v129, 0.0
    %134 = vadd.xlane.f32.xlu0 %v133
    %v135 = vpop.xlane.xlu0 %134
    %v136 = vsel %vm111, %v128, 0.0
    %v137 = vsel %vm112, %v129, 0.0
    %v138 = vsub.f32 %v132, %v136
    %v139 = vsub.f32 %v135, %v137
    %v140 = vlog2.pop %v138
    %v141 = vmul.f32 %v140, 0.6931472
    %v142 = vlog2.pop %v139
    %v143 = vmul.f32 %v142, 0.6931472
    %v144 = vsub.f32 %v122, %v141
    %v145 = vsub.f32 %v123, %v143
    %v146 = vsel %vm113, %v144, 0.0
    %v147 = vsel %vm114, %v145, 0.0
    %v148 = vsel %vm115, %v146, 0.0
    %149 = vadd.xlane.f32.xlu0 %v148
    %v150 = vpop.xlane.xlu0 %149
    %v151 = vsel %vm115, %v147, 0.0
    %152 = vadd.xlane.f32.xlu0 %v151
    %v153 = vpop.xlane.xlu0 %152
    %154 = vst [vmem:[#allocation2] sm:$0xff] %v150
    %155 = vst [vmem:[#allocation2 + $0x8] sm:$0xff] %v153
    // Predicated region
    $region18: #{tpu_custom_call.1} parent=1 // pred_check
      _
    $region19: #{tpu_custom_call.1} parent=1 // pred_check_branch
      %157 = sbr.rel (0) target = $region21
    $region20: #{tpu_custom_call.1} parent=1 // pred_region
      %s159 = ssub.s32 256, 256
      %160 = vsyncadd [#allocation3], %s159
      %s161 = sshll.u32 [#allocation2], 4
      %s162 = int_to_ptr.vmem [resolvable:$true] %s161
      %167 = dma.vmem_to_hbm [thread:$0]  %s162, 256, %s4, [#allocation3], 128, 128, 8
    $region21: #{tpu_custom_call.1} parent=1 // pred_fallthru
      _
    // Predicated region
    $region22: #{tpu_custom_call.1} parent=1 // pred_check
      _
    $region23: #{tpu_custom_call.1} parent=1 // pred_check_branch
      %169 = sbr.rel (0) target = $region25
    $region24: #{tpu_custom_call.1} parent=1 // pred_region
      %170 = dma.done [#allocation3], 256
    $region25: #{tpu_custom_call.1} parent=1 // pred_fallthru
      _
    %171 = vsyncpa [#allocation3], 1

</llo_original>
